<compile_context>
chip_gen: v7x
topology: tpu7x:2x2x1
jax: 0.10.0
libtpu: 0.0.40
codegen_flags: <defaults>
</compile_context>

<pallas_src>
import jax
import jax.numpy as jnp
from jax import lax
from jax.experimental import pallas as pl
from jax.experimental.pallas import tpu as pltpu

EPS = 1e-5


def _cdiv(a, b):
    return -(-a // b)


def _vmem_limit_bytes():
    """Generation-aware scoped-VMEM limit: 3/4 of physical VMEM, >= 32 MiB."""
    try:
        cap = int(pltpu.get_tpu_info().vmem_capacity_bytes)
    except Exception:                      # off-TPU trace / older API: v7x-safe
        cap = 64 * 1024 * 1024
    return max(32 * 1024 * 1024, (cap * 3) // 4)


def _pick_row_tile(batch, ho, wo, c4, vmem_limit):
    """sd rows (TI) per grid step: VMEM-budgeted, <=~1024 matmul rows, and an
    even total tile count so both v7x TensorCores stay busy."""
    cin = c4 // 4
    # live bytes per matmul row: 2x double-buffered input block (bf16) +
    # fused (M,16C) operand (bf16) + f32 conv activation + (M,2C) 1x1 operand.
    bytes_per_row = wo * (2 * 2 * c4 + 2 * 4 * c4 + 4 * cin + 2 * 2 * cin)
    budget_rows = max(1, (vmem_limit // 3) // max(bytes_per_row, 1))
    target_rows = max(1, min(budget_rows, max(1, 1024 // max(wo, 1))))
    ti = max(1, min(ho, target_rows))
    nti = _cdiv(ho, ti)
    if (batch * nti) % 2 == 1 and ho > 1:      # prefer even tile count (2 TCs)
        nti = min(ho, nti + 1)
        ti = _cdiv(ho, nti)
    return ti


# ---------------------------------------------------------------------------
# Fused kernel: whole MP2 forward for TI rows of output pixels of one image.
#   cur : (1, TI, Wo+1, 4C) bf16   sd rows [i*TI, i*TI+TI)
#   nxt : (1, 1,  Wo+1, 4C) bf16   sd halo row i*TI+TI (same HBM buffer)
#   w1  : (16C, Cin) bf16   phase-decomposed 3x3/s2 weights (BN folded)
#   b1  : (1, Cin)  f32
#   w2  : (2C, Cout) bf16   1x1 weights over [maxpool | conv] (BN folded)
#   b2  : (1, Cout) f32
#   out : (1, TI, Wo, Cout) bf16
# ---------------------------------------------------------------------------
def _mp2_kernel(cur_ref, halo_ref, w1_ref, b1_ref, w2_ref, b2_ref, o_ref):
    ti, wq, c4 = cur_ref.shape[1], cur_ref.shape[2], cur_ref.shape[3]
    wo = wq - 1
    cin = c4 // 4
    m = ti * wo

    cur = cur_ref[0]                            # (TI, Wo+1, 4C)
    nxt = halo_ref[0]                           # (1,  Wo+1, 4C)
    hi = nxt if ti == 1 else jnp.concatenate([cur[1:], nxt], axis=0)

    # Four shifted space-to-depth views — pure in-VMEM slices, no HBM traffic.
    a00 = cur[:, :wo, :].reshape(m, c4)
    a01 = cur[:, 1:, :].reshape(m, c4)
    a10 = hi[:, :wo, :].reshape(m, c4)
    a11 = hi[:, 1:, :].reshape(m, c4)

    # Branch 1: 3x3 stride-2 conv (+folded BN) as ONE long-K matmul, f32 acc.
    x16 = jnp.concatenate([a00, a01, a10, a11], axis=-1)          # (M, 16C)
    z1 = jnp.dot(x16, w1_ref[...], preferred_element_type=jnp.float32)
    z1 = z1 + b1_ref[...]
    cv = z1 * jax.nn.sigmoid(z1)                                  # SiLU (f32)

    # Branch 2: 2x2 stride-2 max-pool (window lives inside the same views).
    mp = jnp.maximum(
        jnp.maximum(a00[:, 3 * cin:], a01[:, 2 * cin:3 * cin]),
        jnp.maximum(a10[:, cin:2 * cin], a11[:, :cin]))

    # concat([mp, conv]) @ W2 (+folded BN) + SiLU, single K=2C matmul.
    y = jnp.concatenate([mp, cv.astype(jnp.bfloat16)], axis=-1)   # (M, 2C)
    z2 = jnp.dot(y, w2_ref[...], preferred_element_type=jnp.float32)
    z2 = z2 + b2_ref[...]
    o = z2 * jax.nn.sigmoid(z2)
    o_ref[...] = o.reshape(1, ti, wo, o_ref.shape[-1]).astype(o_ref.dtype)


def _mp2_pallas(sd, w1, b1, w2, b2, cout):
    B, hq, wq, c4 = sd.shape
    ho, wo = hq - 1, wq - 1
    cin = c4 // 4
    vmem_limit = _vmem_limit_bytes()
    ti = _pick_row_tile(B, ho, wo, c4, vmem_limit)
    nti = _cdiv(ho, ti)

    def body_map(b, i):
        return (b, i, 0, 0)

    def halo_map(b, i):
        # Single halo row per tile (block size 1 => element-granular index).
        # Clamp keeps the DMA in-bounds on a partial last tile; the clamped row
        # only feeds output rows that Pallas drops anyway.
        return (b, jnp.minimum(i * ti + ti, ho), 0, 0)

    const = lambda b, i: (0, 0)

    return pl.pallas_call(
        _mp2_kernel,
        out_shape=jax.ShapeDtypeStruct((B, ho, wo, cout), jnp.bfloat16),
        grid_spec=pltpu.PrefetchScalarGridSpec(
            num_scalar_prefetch=0,
            grid=(B, nti),
            in_specs=[
                pl.BlockSpec((1, ti, wq, c4), body_map),   # sd body rows
                pl.BlockSpec((1, 1, wq, c4), halo_map),    # sd halo row (same buffer)
                pl.BlockSpec((16 * cin, cin), const),      # fused 3x3/s2 weights
                pl.BlockSpec((1, cin), const),             # conv BN bias
                pl.BlockSpec((2 * cin, cout), const),      # fused 1x1 weights
                pl.BlockSpec((1, cout), const),            # 1x1 BN bias
            ],
            out_specs=pl.BlockSpec((1, ti, wo, cout), lambda b, i: (b, i, 0, 0)),
        ),
        compiler_params=pltpu.CompilerParams(
            dimension_semantics=("parallel", "parallel"),
            vmem_limit_bytes=vmem_limit),
    )(sd, sd, w1, b1, w2, b2)


# ---------------------------------------------------------------------------
# One-time parameter folding (eval-mode BN -> weights/bias, phase decomposition)
# ---------------------------------------------------------------------------
def _fold_bn(gamma, beta, mean, var):
    scale = gamma / jnp.sqrt(var + EPS)
    return scale, beta - mean * scale


def fold_mp2_params(params):
    w1, g1, b1, m1, v1 = params["conv"]        # (Cin, Cin, 3, 3)  torch OIHW
    w2, g2, b2, m2, v2 = params["conv2"]       # (Cout, 2*Cin, 1, 1)
    cin = w1.shape[1]
    cout = w2.shape[0]

    s1, bias1 = _fold_bn(g1, b1, m1, v1)
    w1f = w1 * s1[:, None, None, None]
    # Phase (di, dj) = which shifted space-to-depth view the tap reads from;
    # sub-position (pr, pc) = which Cin slice of that view's 4*Cin channels.
    w1p = jnp.zeros((2, 2, 4 * cin, cin), jnp.float32)
    for kh in range(3):
        for kw in range(3):
            di, pr = kh // 2, kh % 2
            dj, pc = kw // 2, kw % 2
            sub = pr * 2 + pc
            w1p = w1p.at[di, dj, sub * cin:(sub + 1) * cin, :].set(
                jnp.transpose(w1f[:, :, kh, kw]))
    # One (16*Cin, Cin) matrix; row blocks ordered [a00 | a01 | a10 | a11].
    w1p = w1p.reshape(16 * cin, cin).astype(jnp.bfloat16)

    s2, bias2 = _fold_bn(g2, b2, m2, v2)
    w2f = w2[:, :, 0, 0] * s2[:, None]                     # (Cout, 2*Cin)
    w2p = jnp.transpose(w2f).astype(jnp.bfloat16)          # (2*Cin, Cout): [mp|conv]

    return {"w1": w1p, "b1": bias1.reshape(1, cin).astype(jnp.float32),
            "w2": w2p, "b2": bias2.reshape(1, cout).astype(jnp.float32),
            "cout": cout}


# ---------------------------------------------------------------------------
# Forward wrapper: minimal layout plumbing (bf16 first, pad + s2d built once)
# ---------------------------------------------------------------------------
def mp2_forward(folded, x_nchw):
    B, C, H, W = x_nchw.shape
    assert H % 2 == 0 and W % 2 == 0, "MP2 needs even H/W (torch.cat mismatches otherwise)"
    ho, wo = H // 2, W // 2
    # Cast to bf16 FIRST so every wrapper layout pass moves half the bytes.
    x = jnp.transpose(x_nchw.astype(jnp.bfloat16), (0, 2, 3, 1))            # NHWC
    xp = jnp.pad(x, ((0, 0), (1, 1), (1, 1), (0, 0)))                       # conv pad=1
    # 2x2 space-to-depth, built ONCE; kernel re-reads it with a 1-row halo.
    sd = xp.reshape(B, ho + 1, 2, wo + 1, 2, C)
    sd = jnp.transpose(sd, (0, 1, 3, 2, 4, 5)).reshape(B, ho + 1, wo + 1, 4 * C)
    out = _mp2_pallas(sd, folded["w1"], folded["b1"], folded["w2"], folded["b2"],
                      folded["cout"])                                        # bf16 NHWC
    # TODO(synk): if the surrounding model is NHWC/bf16, return `out` directly
    # and skip this transpose + f32 upcast.
    return jnp.transpose(out, (0, 3, 1, 2)).astype(jnp.float32)              # NCHW f32


# ---------------------------------------------------------------------------
# Deterministic parameter construction (mirrors the module __init__ shapes)
# ---------------------------------------------------------------------------
def make_conv_params(key, cin, cout, k):
    kw_, kg, kb, km, kv = jax.random.split(key, 5)
    w = 0.1 * jax.random.normal(kw_, (cout, cin, k, k), jnp.float32)
    gamma = 1.0 + 0.1 * jax.random.normal(kg, (cout,), jnp.float32)
    beta = 0.1 * jax.random.normal(kb, (cout,), jnp.float32)
    mean = 0.1 * jax.random.normal(km, (cout,), jnp.float32)
    var = 0.5 + 0.1 * jnp.abs(jax.random.normal(kv, (cout,), jnp.float32))
    return (w, gamma, beta, mean, var)


def mp2_init(key, inch, outch):
    k1, k2 = jax.random.split(key)
    return {"conv": make_conv_params(k1, inch, inch, 3),        # Conv(inch, inch, 3, 2, 1)
            "conv2": make_conv_params(k2, 2 * inch, outch, 1)}  # Conv(2*inch, outch, 1, 1, 0)


# ---------------------------------------------------------------------------
# Pure-JAX reference (eval-mode BN), used only for a correctness check
# ---------------------------------------------------------------------------
def _bn_eval(x, gamma, beta, mean, var):
    inv = gamma / jnp.sqrt(var + EPS)
    return x * inv[None, :, None, None] + (beta - mean * inv)[None, :, None, None]


def mp2_reference(params, x):
    w1, g1, b1, m1, v1 = params["conv"]
    w2, g2, b2, m2, v2 = params["conv2"]
    mp = lax.reduce_window(x, -jnp.inf, lax.max, (1, 1, 2, 2), (1, 1, 2, 2), "VALID")
    c = lax.conv_general_dilated(x, w1, (2, 2), ((1, 1), (1, 1)),
                                 dimension_numbers=("NCHW", "OIHW", "NCHW"))
    c = _bn_eval(c, g1, b1, m1, v1)
    c = c * jax.nn.sigmoid(c)
    y = jnp.concatenate([mp, c], axis=1)
    z = lax.conv_general_dilated(y, w2, (1, 1), ((0, 0), (0, 0)),
                                 dimension_numbers=("NCHW", "OIHW", "NCHW"))
    z = _bn_eval(z, g2, b2, m2, v2)
    return z * jax.nn.sigmoid(z)


if __name__ == "__main__":
    key = jax.random.PRNGKey(0)
    kx, kp = jax.random.split(key)
    B, inch, outch, H, W = 2, 4, 8, 16, 16
    x = jax.random.normal(kx, (B, inch, H, W), jnp.float32)

    params = mp2_init(kp, inch, outch)
    folded = fold_mp2_params(params)

    fwd = jax.jit(lambda xx: mp2_forward(folded, xx))
    out = jax.block_until_ready(fwd(x))
    assert out.shape == (B, outch, H // 2, W // 2), out.shape
    assert bool(jnp.all(jnp.isfinite(out)))

    ref = mp2_reference(params, x)
    max_err = float(jnp.max(jnp.abs(out - ref)))
    assert max_err < 1e-1, f"max abs error vs reference: {max_err}"
    print("KERNEL_OK")
</pallas_src>

<mosaic_0001>
module attributes {stable_mosaic.version = 11 : i64} {
  func.func @_mp2_kernel(%arg0: i32, %arg1: i32, %arg2: memref<1x8x9x16xbf16, #tpu.memory_space<vmem>>, %arg3: memref<1x1x9x16xbf16, #tpu.memory_space<vmem>>, %arg4: memref<64x4xbf16, #tpu.memory_space<vmem>>, %arg5: memref<1x4xf32, #tpu.memory_space<vmem>>, %arg6: memref<8x8xbf16, #tpu.memory_space<vmem>>, %arg7: memref<1x8xf32, #tpu.memory_space<vmem>>, %arg8: memref<1x8x8x8xbf16, #tpu.memory_space<vmem>>) attributes {dimension_semantics = [#tpu.dimension_semantics<parallel>, #tpu.dimension_semantics<parallel>], iteration_bounds = array<i64: 2, 1>, scalar_prefetch = 0 : i64, scratch_operands = 0 : i64, tpu.core_type = #tpu.core_type<tc>, window_params = [{transform_indices = @transform_0, window_bounds = array<i64: 1, 8, 9, 16>}, {transform_indices = @transform_1, window_bounds = array<i64: 1, 1, 9, 16>}, {pipeline_mode = #tpu.pipeline_mode<synchronous>, transform_indices = @transform_2, window_bounds = array<i64: 64, 4>}, {pipeline_mode = #tpu.pipeline_mode<synchronous>, transform_indices = @transform_3, window_bounds = array<i64: 1, 4>}, {pipeline_mode = #tpu.pipeline_mode<synchronous>, transform_indices = @transform_4, window_bounds = array<i64: 8, 8>}, {pipeline_mode = #tpu.pipeline_mode<synchronous>, transform_indices = @transform_5, window_bounds = array<i64: 1, 8>}, {transform_indices = @transform_6, window_bounds = array<i64: 1, 8, 8, 8>}]} {
    %c0 = arith.constant 0 : index
    %c0_0 = arith.constant 0 : index
    %c0_1 = arith.constant 0 : index
    %c0_2 = arith.constant 0 : index
    %0 = vector.load %arg2[%c0, %c0_0, %c0_1, %c0_2] : memref<1x8x9x16xbf16, #tpu.memory_space<vmem>>, vector<1x8x9x16xbf16>
    %1 = vector.shape_cast %0 : vector<1x8x9x16xbf16> to vector<8x9x16xbf16>
    %c0_3 = arith.constant 0 : index
    %c0_4 = arith.constant 0 : index
    %c0_5 = arith.constant 0 : index
    %c0_6 = arith.constant 0 : index
    %2 = vector.load %arg3[%c0_3, %c0_4, %c0_5, %c0_6] : memref<1x1x9x16xbf16, #tpu.memory_space<vmem>>, vector<1x1x9x16xbf16>
    %3 = vector.shape_cast %2 : vector<1x1x9x16xbf16> to vector<1x9x16xbf16>
    %4 = vector.extract_strided_slice %1 {offsets = [1, 0, 0], sizes = [7, 9, 16], strides = [1, 1, 1]} : vector<8x9x16xbf16> to vector<7x9x16xbf16>
    %5 = tpu.concatenate %4, %3 in 0 : vector<7x9x16xbf16>, vector<1x9x16xbf16> -> vector<8x9x16xbf16>
    %6 = vector.extract_strided_slice %1 {offsets = [0, 0, 0], sizes = [8, 8, 16], strides = [1, 1, 1]} : vector<8x9x16xbf16> to vector<8x8x16xbf16>
    %7 = vector.shape_cast %6 : vector<8x8x16xbf16> to vector<64x16xbf16>
    %8 = vector.extract_strided_slice %1 {offsets = [0, 1, 0], sizes = [8, 8, 16], strides = [1, 1, 1]} : vector<8x9x16xbf16> to vector<8x8x16xbf16>
    %9 = vector.shape_cast %8 : vector<8x8x16xbf16> to vector<64x16xbf16>
    %10 = vector.extract_strided_slice %5 {offsets = [0, 0, 0], sizes = [8, 8, 16], strides = [1, 1, 1]} : vector<8x9x16xbf16> to vector<8x8x16xbf16>
    %11 = vector.shape_cast %10 : vector<8x8x16xbf16> to vector<64x16xbf16>
    %12 = vector.extract_strided_slice %5 {offsets = [0, 1, 0], sizes = [8, 8, 16], strides = [1, 1, 1]} : vector<8x9x16xbf16> to vector<8x8x16xbf16>
    %13 = vector.shape_cast %12 : vector<8x8x16xbf16> to vector<64x16xbf16>
    %14 = tpu.concatenate %7, %9, %11, %13 in 1 : vector<64x16xbf16>, vector<64x16xbf16>, vector<64x16xbf16>, vector<64x16xbf16> -> vector<64x64xbf16>
    %c0_7 = arith.constant 0 : index
    %c0_8 = arith.constant 0 : index
    %15 = vector.load %arg4[%c0_7, %c0_8] : memref<64x4xbf16, #tpu.memory_space<vmem>>, vector<64x4xbf16>
    %cst = arith.constant dense<0.000000e+00> : vector<64x4xf32>
    %16 = tpu.matmul %14, %15, %cst {dimension_numbers = #tpu.dot_dimension_numbers<[1], [0], [0], [1], [0, 0, 1, 1], [], []>} : vector<64x64xbf16>, vector<64x4xbf16>, vector<64x4xf32> -> vector<64x4xf32>
    %c0_9 = arith.constant 0 : index
    %c0_10 = arith.constant 0 : index
    %17 = vector.load %arg5[%c0_9, %c0_10] : memref<1x4xf32, #tpu.memory_space<vmem>>, vector<1x4xf32>
    %18 = vector.broadcast %17 : vector<1x4xf32> to vector<64x4xf32>
    %19 = arith.addf %16, %18 : vector<64x4xf32>
    %20 = arith.negf %19 : vector<64x4xf32>
    %21 = math.exp %20 : vector<64x4xf32>
    %cst_11 = arith.constant 1.000000e+00 : f32
    %22 = vector.broadcast %cst_11 : f32 to vector<64x4xf32>
    %23 = arith.addf %22, %21 : vector<64x4xf32>
    %24 = arith.divf %22, %23 : vector<64x4xf32>
    %25 = arith.mulf %19, %24 : vector<64x4xf32>
    %26 = vector.extract_strided_slice %7 {offsets = [0, 12], sizes = [64, 4], strides = [1, 1]} : vector<64x16xbf16> to vector<64x4xbf16>
    %27 = vector.extract_strided_slice %9 {offsets = [0, 8], sizes = [64, 4], strides = [1, 1]} : vector<64x16xbf16> to vector<64x4xbf16>
    %28 = arith.maximumf %26, %27 : vector<64x4xbf16>
    %29 = vector.extract_strided_slice %11 {offsets = [0, 4], sizes = [64, 4], strides = [1, 1]} : vector<64x16xbf16> to vector<64x4xbf16>
    %30 = vector.extract_strided_slice %13 {offsets = [0, 0], sizes = [64, 4], strides = [1, 1]} : vector<64x16xbf16> to vector<64x4xbf16>
    %31 = arith.maximumf %29, %30 : vector<64x4xbf16>
    %32 = arith.maximumf %28, %31 : vector<64x4xbf16>
    %33 = arith.truncf %25 : vector<64x4xf32> to vector<64x4xbf16>
    %34 = tpu.concatenate %32, %33 in 1 : vector<64x4xbf16>, vector<64x4xbf16> -> vector<64x8xbf16>
    %c0_12 = arith.constant 0 : index
    %c0_13 = arith.constant 0 : index
    %35 = vector.load %arg6[%c0_12, %c0_13] : memref<8x8xbf16, #tpu.memory_space<vmem>>, vector<8x8xbf16>
    %cst_14 = arith.constant dense<0.000000e+00> : vector<64x8xf32>
    %36 = tpu.matmul %34, %35, %cst_14 {dimension_numbers = #tpu.dot_dimension_numbers<[1], [0], [0], [1], [0, 0, 1, 1], [], []>} : vector<64x8xbf16>, vector<8x8xbf16>, vector<64x8xf32> -> vector<64x8xf32>
    %c0_15 = arith.constant 0 : index
    %c0_16 = arith.constant 0 : index
    %37 = vector.load %arg7[%c0_15, %c0_16] : memref<1x8xf32, #tpu.memory_space<vmem>>, vector<1x8xf32>
    %38 = vector.broadcast %37 : vector<1x8xf32> to vector<64x8xf32>
    %39 = arith.addf %36, %38 : vector<64x8xf32>
    %40 = arith.negf %39 : vector<64x8xf32>
    %41 = math.exp %40 : vector<64x8xf32>
    %cst_17 = arith.constant 1.000000e+00 : f32
    %42 = vector.broadcast %cst_17 : f32 to vector<64x8xf32>
    %43 = arith.addf %42, %41 : vector<64x8xf32>
    %44 = arith.divf %42, %43 : vector<64x8xf32>
    %45 = arith.mulf %39, %44 : vector<64x8xf32>
    %46 = vector.shape_cast %45 : vector<64x8xf32> to vector<1x8x8x8xf32>
    %47 = arith.truncf %46 : vector<1x8x8x8xf32> to vector<1x8x8x8xbf16>
    %c0_18 = arith.constant 0 : index
    %c0_19 = arith.constant 0 : index
    %c0_20 = arith.constant 0 : index
    %c0_21 = arith.constant 0 : index
    %48 = vector.load %arg8[%c0_18, %c0_19, %c0_20, %c0_21] : memref<1x8x8x8xbf16, #tpu.memory_space<vmem>>, vector<1x8x8x8xbf16>
    tpu.vector_store %arg8[%c0_18, %c0_19, %c0_20, %c0_21], %47 {strides = array<i32>} : memref<1x8x8x8xbf16, #tpu.memory_space<vmem>>, vector<1x8x8x8xbf16>,
    return
  }
  func.func @transform_0(%arg0: i32, %arg1: i32) -> (i32, i32, i32, i32) {
    %c0_i32 = arith.constant 0 : i32
    %c0_i32_0 = arith.constant 0 : i32
    %c0_i32_1 = arith.constant 0 : i32
    return %arg0, %arg1, %c0_i32, %c0_i32_0 : i32, i32, i32, i32
  }
  func.func @transform_1(%arg0: i32, %arg1: i32) -> (i32, i32, i32, i32) {
    %c8_i32 = arith.constant 8 : i32
    %0 = arith.muli %arg1, %c8_i32 : i32
    %c8_i32_0 = arith.constant 8 : i32
    %1 = arith.addi %0, %c8_i32_0 : i32
    %c8_i32_1 = arith.constant 8 : i32
    %2 = arith.minsi %1, %c8_i32_1 : i32
    %c0_i32 = arith.constant 0 : i32
    %c0_i32_2 = arith.constant 0 : i32
    %c0_i32_3 = arith.constant 0 : i32
    return %arg0, %2, %c0_i32, %c0_i32_2 : i32, i32, i32, i32
  }
  func.func @transform_2(%arg0: i32, %arg1: i32) -> (i32, i32) {
    %c0_i32 = arith.constant 0 : i32
    %c0_i32_0 = arith.constant 0 : i32
    %c0_i32_1 = arith.constant 0 : i32
    return %c0_i32, %c0_i32_0 : i32, i32
  }
  func.func @transform_3(%arg0: i32, %arg1: i32) -> (i32, i32) {
    %c0_i32 = arith.constant 0 : i32
    %c0_i32_0 = arith.constant 0 : i32
    %c0_i32_1 = arith.constant 0 : i32
    return %c0_i32, %c0_i32_0 : i32, i32
  }
  func.func @transform_4(%arg0: i32, %arg1: i32) -> (i32, i32) {
    %c0_i32 = arith.constant 0 : i32
    %c0_i32_0 = arith.constant 0 : i32
    %c0_i32_1 = arith.constant 0 : i32
    return %c0_i32, %c0_i32_0 : i32, i32
  }
  func.func @transform_5(%arg0: i32, %arg1: i32) -> (i32, i32) {
    %c0_i32 = arith.constant 0 : i32
    %c0_i32_0 = arith.constant 0 : i32
    %c0_i32_1 = arith.constant 0 : i32
    return %c0_i32, %c0_i32_0 : i32, i32
  }
  func.func @transform_6(%arg0: i32, %arg1: i32) -> (i32, i32, i32, i32) {
    %c0_i32 = arith.constant 0 : i32
    %c0_i32_0 = arith.constant 0 : i32
    %c0_i32_1 = arith.constant 0 : i32
    return %arg0, %arg1, %c0_i32, %c0_i32_0 : i32, i32, i32, i32
  }
}

</mosaic_0001>

<llo_original>
// kernel: _lambda_.1
$region0: #{_lambda_.1}
  #allocation0 [shape = 'u32[]', space=smem, size = 0x4, offset = 0x4, fixed_abs, tag = 'smem constant byte address 0x4 - core index']
  #allocation1 [shape = 'u32[144,128]{1,0:T(1,128)}', space=vmem, size = 0x12000, scoped, tag = 'internal scratch']
  %s0 = inlined_call_operand.vmem [shape: bf16[2,9,9,16], index: 0, kind: input, shape index: {}, may-alias: {0,1}]
  %s1 = inlined_call_operand.vmem [shape: bf16[2,9,9,16], index: 1, kind: input, shape index: {}, may-alias: {0,1}]
  %s2 = inlined_call_operand.vmem [shape: bf16[64,4], index: 2, kind: input, shape index: {}]
  %s3 = inlined_call_operand.vmem [shape: f32[1,4], index: 3, kind: input, shape index: {}]
  %s4 = inlined_call_operand.vmem [shape: bf16[8,8], index: 4, kind: input, shape index: {}]
  %s5 = inlined_call_operand.vmem [shape: f32[1,8], index: 5, kind: input, shape index: {}]
  %s6 = inlined_call_operand.vmem [shape: bf16[2,8,8,8], index: 6, kind: output, shape index: {}]
  %s7 = sld [smem:[#allocation0]]
  $region57: #{_lambda_.1} parent=0
    _
  %s9 = ssub.s32 1, %s7
  %s10 = scalar_select 0, %s9, %s7
  loop: start=0, step=1, limit=4
  $region2: #{_lambda_.1} parent=0 // loop_pre_header
    _
  $region3: #{_lambda_.1} parent=0 // loop_header
    %s12 = sphi 0, %s16
    %p13 = scmp.ge.s32.totalorder %s12, 4
    %s19 = sphi 0, %s31
    %s20 = sphi 0, %s27
    %s21 = sphi 0, %s19
    %s22 = sphi 0, %s20
    %s23 = sphi 0, %s21
    %s24 = sphi 0, %s22
    %s36 = sphi 0, %s38
    %s39 = sphi 0, %s36
    %s40 = sphi 0, %s39
    %s56 = sphi 0, %s40
    %s72 = sphi 0, %s74
    %s75 = sphi 0, %s72
    %s76 = sphi 0, %s75
    %s92 = sphi 0, %s76
    %s96 = sphi 0, %s96
    %s98 = sphi 0, %s96
    %s99 = sphi 0, %s98
    %s113 = sphi 0, %s99
    %s117 = sphi 0, %s117
    %s119 = sphi 0, %s117
    %s120 = sphi 0, %s119
    %s134 = sphi 0, %s120
    %s138 = sphi 0, %s138
    %s140 = sphi 0, %s138
    %s141 = sphi 0, %s140
    %s155 = sphi 0, %s141
    %s159 = sphi 0, %s159
    %s161 = sphi 0, %s159
    %s162 = sphi 0, %s161
    %s176 = sphi 0, %s162
    %s184 = sphi 0, %s186
    %s187 = sphi 0, %s184
    %s188 = sphi 0, %s187
    %s204 = sphi 0, %s188
  $region4: #{_lambda_.1} parent=0 // loop_header_branch
    %15 = sbr.rel (%p13) target = $region8
  $region5: #{_lambda_.1} parent=0 // loop_body
    %s17 = ssub.s32 %s12, 1
    %s18 = ssub.s32 %s12, 2
    %s25 = sadd.s32 1, %s20
    %p26 = scmp.ge.s32.totalorder %s25, 1
    %s27 = scalar_select %p26, 0, %s25
    %s28 = sadd.s32 1, %s19
    %s29 = scalar_select %p26, %s28, %s19
    %p30 = scmp.ge.s32.totalorder %s29, 2
    %s31 = scalar_select %p30, 0, %s29
    %s32 = ssub.s32 %s19, %s31
    %s33 = ssub.s32 %s20, %s27
    %s34 = sor.u32 %s32, %s33
    %p35 = scmp.eq.s32.totalorder %s34, 0
    %s37 = sadd.s32 %s36, 1
    %s38 = scalar_select %p35, %s36, %s37
    %p41 = pneg %p35
    %p42 = scmp.eq.s32.totalorder %s12, 1
    %p43 = por %p41, %p42
    %p44 = scmp.ne.s32.totalorder %s36, %s39
    %p45 = scmp.eq.s32.totalorder %s12, 0
    %p46 = por %p44, %p45
    %p47 = scmp.ne.s32.totalorder %s36, %s39
    %p48 = scmp.eq.s32.totalorder %s17, 1
    %p49 = por %p47, %p48
    %p50 = scmp.ne.s32.totalorder %s39, %s40
    %p51 = scmp.eq.s32.totalorder %s17, 0
    %p52 = por %p50, %p51
    %p53 = scmp.ne.s32.totalorder %s39, %s40
    %p54 = scmp.eq.s32.totalorder %s18, 1
    %p55 = por %p53, %p54
    %p57 = scmp.ne.s32.totalorder %s40, %s56
    %p58 = scmp.eq.s32.totalorder %s18, 0
    %p59 = por %p57, %p58
    %s60 = smul.u32 %s20, 8
    %s61 = sadd.s32 %s60, 8
    %p62 = scmp.lt.s32.totalorder %s61, 8
    %s63 = scalar_select %p62, %s61, 8
    %s64 = smul.u32 %s27, 8
    %s65 = sadd.s32 %s64, 8
    %p66 = scmp.lt.s32.totalorder %s65, 8
    %s67 = scalar_select %p66, %s65, 8
    %s68 = ssub.s32 %s19, %s31
    %s69 = ssub.s32 %s63, %s67
    %s70 = sor.u32 %s68, %s69
    %p71 = scmp.eq.s32.totalorder %s70, 0
    %s73 = sadd.s32 %s72, 1
    %s74 = scalar_select %p71, %s72, %s73
    %p77 = pneg %p71
    %p78 = scmp.eq.s32.totalorder %s12, 1
    %p79 = por %p77, %p78
    %p80 = scmp.ne.s32.totalorder %s72, %s75
    %p81 = scmp.eq.s32.totalorder %s12, 0
    %p82 = por %p80, %p81
    %p83 = scmp.ne.s32.totalorder %s72, %s75
    %p84 = scmp.eq.s32.totalorder %s17, 1
    %p85 = por %p83, %p84
    %p86 = scmp.ne.s32.totalorder %s75, %s76
    %p87 = scmp.eq.s32.totalorder %s17, 0
    %p88 = por %p86, %p87
    %p89 = scmp.ne.s32.totalorder %s75, %s76
    %p90 = scmp.eq.s32.totalorder %s18, 1
    %p91 = por %p89, %p90
    %p93 = scmp.ne.s32.totalorder %s76, %s92
    %p94 = scmp.eq.s32.totalorder %s18, 0
    %p95 = por %p93, %p94
    %s97 = sadd.s32 %s96, 1
    %p100 = scmp.eq.s32.totalorder %s12, 1
    %p101 = scmp.ne.s32.totalorder %s96, %s98
    %p102 = scmp.eq.s32.totalorder %s12, 0
    %p103 = por %p101, %p102
    %p104 = scmp.ne.s32.totalorder %s96, %s98
    %p105 = scmp.eq.s32.totalorder %s17, 1
    %p106 = por %p104, %p105
    %p107 = scmp.ne.s32.totalorder %s98, %s99
    %p108 = scmp.eq.s32.totalorder %s17, 0
    %p109 = por %p107, %p108
    %p110 = scmp.ne.s32.totalorder %s98, %s99
    %p111 = scmp.eq.s32.totalorder %s18, 1
    %p112 = por %p110, %p111
    %p114 = scmp.ne.s32.totalorder %s99, %s113
    %p115 = scmp.eq.s32.totalorder %s18, 0
    %p116 = por %p114, %p115
    %s118 = sadd.s32 %s117, 1
    %p121 = scmp.eq.s32.totalorder %s12, 1
    %p122 = scmp.ne.s32.totalorder %s117, %s119
    %p123 = scmp.eq.s32.totalorder %s12, 0
    %p124 = por %p122, %p123
    %p125 = scmp.ne.s32.totalorder %s117, %s119
    %p126 = scmp.eq.s32.totalorder %s17, 1
    %p127 = por %p125, %p126
    %p128 = scmp.ne.s32.totalorder %s119, %s120
    %p129 = scmp.eq.s32.totalorder %s17, 0
    %p130 = por %p128, %p129
    %p131 = scmp.ne.s32.totalorder %s119, %s120
    %p132 = scmp.eq.s32.totalorder %s18, 1
    %p133 = por %p131, %p132
    %p135 = scmp.ne.s32.totalorder %s120, %s134
    %p136 = scmp.eq.s32.totalorder %s18, 0
    %p137 = por %p135, %p136
    %s139 = sadd.s32 %s138, 1
    %p142 = scmp.eq.s32.totalorder %s12, 1
    %p143 = scmp.ne.s32.totalorder %s138, %s140
    %p144 = scmp.eq.s32.totalorder %s12, 0
    %p145 = por %p143, %p144
    %p146 = scmp.ne.s32.totalorder %s138, %s140
    %p147 = scmp.eq.s32.totalorder %s17, 1
    %p148 = por %p146, %p147
    %p149 = scmp.ne.s32.totalorder %s140, %s141
    %p150 = scmp.eq.s32.totalorder %s17, 0
    %p151 = por %p149, %p150
    %p152 = scmp.ne.s32.totalorder %s140, %s141
    %p153 = scmp.eq.s32.totalorder %s18, 1
    %p154 = por %p152, %p153
    %p156 = scmp.ne.s32.totalorder %s141, %s155
    %p157 = scmp.eq.s32.totalorder %s18, 0
    %p158 = por %p156, %p157
    %s160 = sadd.s32 %s159, 1
    %p163 = scmp.eq.s32.totalorder %s12, 1
    %p164 = scmp.ne.s32.totalorder %s159, %s161
    %p165 = scmp.eq.s32.totalorder %s12, 0
    %p166 = por %p164, %p165
    %p167 = scmp.ne.s32.totalorder %s159, %s161
    %p168 = scmp.eq.s32.totalorder %s17, 1
    %p169 = por %p167, %p168
    %p170 = scmp.ne.s32.totalorder %s161, %s162
    %p171 = scmp.eq.s32.totalorder %s17, 0
    %p172 = por %p170, %p171
    %p173 = scmp.ne.s32.totalorder %s161, %s162
    %p174 = scmp.eq.s32.totalorder %s18, 1
    %p175 = por %p173, %p174
    %p177 = scmp.ne.s32.totalorder %s162, %s176
    %p178 = scmp.eq.s32.totalorder %s18, 0
    %p179 = por %p177, %p178
    %s180 = ssub.s32 %s19, %s31
    %s181 = ssub.s32 %s20, %s27
    %s182 = sor.u32 %s180, %s181
    %p183 = scmp.eq.s32.totalorder %s182, 0
    %s185 = sadd.s32 %s184, 1
    %s186 = scalar_select %p183, %s184, %s185
    %p189 = pneg %p183
    %p190 = scmp.eq.s32.totalorder %s12, 1
    %p191 = por %p189, %p190
    %p192 = scmp.ne.s32.totalorder %s184, %s187
    %p193 = scmp.eq.s32.totalorder %s12, 0
    %p194 = por %p192, %p193
    %p195 = scmp.ne.s32.totalorder %s184, %s187
    %p196 = scmp.eq.s32.totalorder %s17, 1
    %p197 = por %p195, %p196
    %p198 = scmp.ne.s32.totalorder %s187, %s188
    %p199 = scmp.eq.s32.totalorder %s17, 0
    %p200 = por %p198, %p199
    %p201 = scmp.ne.s32.totalorder %s187, %s188
    %p202 = scmp.eq.s32.totalorder %s18, 1
    %p203 = por %p201, %p202
    %p205 = scmp.ne.s32.totalorder %s188, %s204
    %p206 = scmp.eq.s32.totalorder %s18, 0
    %p207 = por %p205, %p206
    %p208 = scmp.le.s32.totalorder 1, %s12
    %p209 = scmp.lt.s32.totalorder %s12, 3
    %p210 = pnand %p208, %p209
    %p211 = pneg %p210
    // Predicated region
    $region9: #{_lambda_.1} parent=5 // pred_check
      _
    $region10: #{_lambda_.1} parent=5 // pred_check_branch
      %213 = sbr.rel (%p210) target = $region12
    $region11: #{_lambda_.1} parent=5 // pred_region
      %s214 = ssub.s32 %s12, 1
      // Predicated region
      $region13: #{_lambda_.1} parent=11 // pred_check
        %p215 = pneg %p109
      $region14: #{_lambda_.1} parent=11 // pred_check_branch
        %217 = sbr.rel (%p215) target = $region16
      $region15: #{_lambda_.1} parent=11 // pred_region
        _
      $region16: #{_lambda_.1} parent=11 // pred_fallthru
        _
      // Predicated region
      $region17: #{_lambda_.1} parent=11 // pred_check
        %p218 = pneg %p130
      $region18: #{_lambda_.1} parent=11 // pred_check_branch
        %220 = sbr.rel (%p218) target = $region20
      $region19: #{_lambda_.1} parent=11 // pred_region
        _
      $region20: #{_lambda_.1} parent=11 // pred_fallthru
        _
      // Predicated region
      $region21: #{_lambda_.1} parent=11 // pred_check
        %p221 = pneg %p151
      $region22: #{_lambda_.1} parent=11 // pred_check_branch
        %223 = sbr.rel (%p221) target = $region24
      $region23: #{_lambda_.1} parent=11 // pred_region
        _
      $region24: #{_lambda_.1} parent=11 // pred_fallthru
        _
      // Predicated region
      $region25: #{_lambda_.1} parent=11 // pred_check
        %p224 = pneg %p172
      $region26: #{_lambda_.1} parent=11 // pred_check_branch
        %226 = sbr.rel (%p224) target = $region28
      $region27: #{_lambda_.1} parent=11 // pred_region
        _
      $region28: #{_lambda_.1} parent=11 // pred_fallthru
        _
    $region12: #{_lambda_.1} parent=5 // pred_fallthru
      _
    %p227 = scmp.lt.s32.totalorder %s12, 2
    // Predicated region
    $region29: #{_lambda_.1} parent=5 // pred_check
      %p228 = pneg %p227
    $region30: #{_lambda_.1} parent=5 // pred_check_branch
      %230 = sbr.rel (%p228) target = $region32
    $region31: #{_lambda_.1} parent=5 // pred_region
      // Predicated region
      $region33: #{_lambda_.1} parent=31 // pred_check
        %p231 = pneg %p46
      $region34: #{_lambda_.1} parent=31 // pred_check_branch
        %233 = sbr.rel (%p231) target = $region36
      $region35: #{_lambda_.1} parent=31 // pred_region
        %s234 = smul.u32 8, %s20
        %s235 = ssub.s32 9, %s234
        %p236 = scmp.lt.s32.totalorder %s235, 8
        %s237 = scalar_select %p236, %s235, 8
        %s238 = smul.u32 64, %s237
        %s239 = smul.u32 %s238, 2
        %p240 = scmp.lt.s32.totalorder %s19, 1
        %s241 = scalar_select %p240, %s19, 1
        %p242 = scmp.lt.s32.totalorder %s234, 8
        %s243 = scalar_select %p242, %s234, 8
        %s244 = smul.addr %s243, 2
        %s245 = smul.addr %s241, 18
        %s246 = sadd.s32 %s244, %s245
        %s247 = smul.addr %s246, 4
        %s248 = scalar_lea.vmem %s0, %s247
        %s249 = smul.u32 8, %s20
        %s250 = ssub.s32 9, %s249
        %p251 = scmp.lt.s32.totalorder %s250, 8
        %s252 = scalar_select %p251, %s250, 8
        %s253 = smul.u32 64, %s252
        %s254 = smul.u32 %s253, 2
      $region36: #{_lambda_.1} parent=31 // pred_fallthru
        _
      // Predicated region
      $region37: #{_lambda_.1} parent=31 // pred_check
        %p255 = pneg %p82
      $region38: #{_lambda_.1} parent=31 // pred_check_branch
        %257 = sbr.rel (%p255) target = $region40
      $region39: #{_lambda_.1} parent=31 // pred_region
        %s258 = smul.u32 %s20, 8
        %s259 = sadd.s32 %s258, 8
        %p260 = scmp.lt.s32.totalorder %s259, 8
        %s261 = scalar_select %p260, %s259, 8
        %p262 = scmp.lt.s32.totalorder %s19, 1
        %s263 = scalar_select %p262, %s19, 1
        %p264 = scmp.lt.s32.totalorder %s261, 8
        %s265 = scalar_select %p264, %s261, 8
        %s266 = smul.addr %s265, 2
        %s267 = smul.addr %s263, 18
        %s268 = sadd.s32 %s266, %s267
        %s269 = smul.addr %s268, 4
        %s270 = scalar_lea.vmem %s1, %s269
        %s271 = smul.u32 %s20, 8
        %s272 = sadd.s32 %s271, 8
        %p273 = scmp.lt.s32.totalorder %s272, 8
        %s274 = scalar_select %p273, %s272, 8
      $region40: #{_lambda_.1} parent=31 // pred_fallthru
        _
    $region32: #{_lambda_.1} parent=5 // pred_fallthru
      _
    %p275 = scmp.le.s32.totalorder 1, %s12
    %p276 = scmp.lt.s32.totalorder %s12, 3
    %p277 = pnand %p275, %p276
    %p278 = pneg %p277
    // Predicated region
    $region41: #{_lambda_.1} parent=5 // pred_check
      _
    $region42: #{_lambda_.1} parent=5 // pred_check_branch
      %280 = sbr.rel (%p277) target = $region44
    $region43: #{_lambda_.1} parent=5 // pred_region
      %s281 = ssub.s32 %s12, 1
      %s282 = smul.u32 8, %s22
      %s283 = ssub.s32 9, %s282
      %p284 = scmp.lt.s32.totalorder %s283, 8
      %s285 = scalar_select %p284, %s283, 8
      %s286 = smul.u32 64, %s285
      %s287 = smul.u32 %s286, 2
      %p288 = scmp.lt.s32.totalorder %s21, 1
      %s289 = scalar_select %p288, %s21, 1
      %p290 = scmp.lt.s32.totalorder %s282, 8
      %s291 = scalar_select %p290, %s282, 8
      %s292 = smul.addr %s291, 2
      %s293 = smul.addr %s289, 18
      %s294 = sadd.s32 %s292, %s293
      %s295 = smul.addr %s294, 4
      %s296 = scalar_lea.vmem %s0, %s295
      %p297 = pneg %p52
      %p298 = pneg %p49
      %s299 = smul.u32 %s22, 8
      %s300 = sadd.s32 %s299, 8
      %p301 = scmp.lt.s32.totalorder %s300, 8
      %s302 = scalar_select %p301, %s300, 8
      %p303 = scmp.lt.s32.totalorder %s21, 1
      %s304 = scalar_select %p303, %s21, 1
      %p305 = scmp.lt.s32.totalorder %s302, 8
      %s306 = scalar_select %p305, %s302, 8
      %s307 = smul.addr %s306, 2
      %s308 = smul.addr %s304, 18
      %s309 = sadd.s32 %s307, %s308
      %s310 = smul.addr %s309, 4
      %s311 = scalar_lea.vmem %s1, %s310
      %p312 = pneg %p88
      %p313 = pneg %p85
      %p314 = pneg %p109
      %p315 = pneg %p106
      %p316 = pneg %p130
      %p317 = pneg %p127
      %p318 = pneg %p151
      %p319 = pneg %p148
      %p320 = pneg %p172
      %p321 = pneg %p169
      %p322 = pneg %p200
      %p323 = pneg %p197
      %s324 = smul.u32 8, %s22
      %p325 = scmp.lt.s32.totalorder %s21, 1
      %s326 = scalar_select %p325, %s21, 1
      %p327 = scmp.lt.s32.totalorder %s324, 7
      %s328 = scalar_select %p327, %s324, 7
      %s329 = smul.addr %s326, 8
      %s330 = sadd.s32 %s328, %s329
      %s331 = smul.addr %s330, 4
      %s332 = scalar_lea.vmem %s6, %s331
      %s333 = smul.u32 8, %s22
      %s334 = ssub.s32 9, %s333
      %p335 = scmp.lt.s32.totalorder %s334, 8
      %s336 = scalar_select %p335, %s334, 8
      %s337 = smul.u32 64, %s336
      %s338 = smul.u32 %s337, 2
      %p339 = scmp.lt.s32.totalorder %s21, 1
      %s340 = scalar_select %p339, %s21, 1
      %p341 = scmp.lt.s32.totalorder %s333, 8
      %s342 = scalar_select %p341, %s333, 8
      %s343 = smul.addr %s342, 2
      %s344 = smul.addr %s340, 18
      %s345 = sadd.s32 %s343, %s344
      %s346 = smul.addr %s345, 4
      %s347 = scalar_lea.vmem %s0, %s346
      %s348 = smul.u32 8, %s22
      %s349 = ssub.s32 9, %s348
      %p350 = scmp.lt.s32.totalorder %s349, 8
      %s351 = scalar_select %p350, %s349, 8
      %s352 = smul.u32 64, %s351
      %s353 = smul.u32 %s352, 2
      %s354 = smul.u32 %s22, 8
      %s355 = sadd.s32 %s354, 8
      %p356 = scmp.lt.s32.totalorder %s355, 8
      %s357 = scalar_select %p356, %s355, 8
      %p358 = scmp.lt.s32.totalorder %s21, 1
      %s359 = scalar_select %p358, %s21, 1
      %p360 = scmp.lt.s32.totalorder %s357, 8
      %s361 = scalar_select %p360, %s357, 8
      %s362 = smul.addr %s361, 2
      %s363 = smul.addr %s359, 18
      %s364 = sadd.s32 %s362, %s363
      %s365 = smul.addr %s364, 4
      %s366 = scalar_lea.vmem %s1, %s365
      %s367 = smul.u32 %s22, 8
      %s368 = sadd.s32 %s367, 8
      %p369 = scmp.lt.s32.totalorder %s368, 8
      %s370 = scalar_select %p369, %s368, 8
      %s371 = smul.u32 8, %s22
      %p372 = scmp.lt.s32.totalorder %s21, 1
      %s373 = scalar_select %p372, %s21, 1
      %p374 = scmp.lt.s32.totalorder %s371, 7
      %s375 = scalar_select %p374, %s371, 7
      %s376 = smul.addr %s373, 8
      %s377 = sadd.s32 %s375, %s376
      %s378 = smul.addr %s377, 4
      %s379 = scalar_lea.vmem %s6, %s378
      %s380 = smul.u32 8, %s22
      %v382 = vld [vmem:[%s347] sm:$0xf]
      %v383 = vld [vmem:[%s347 + $0x4] sm:$0x1]
      %v384 = vld [vmem:[%s347 + $0x8] sm:$0xf]
      %v385 = vld [vmem:[%s347 + $0xc] sm:$0x1]
      %v386 = vld [vmem:[%s347 + $0x10] sm:$0xf]
      %v387 = vld [vmem:[%s347 + $0x14] sm:$0x1]
      %v388 = vld [vmem:[%s347 + $0x18] sm:$0xf]
      %v389 = vld [vmem:[%s347 + $0x1c] sm:$0x1]
      %v390 = vld [vmem:[%s347 + $0x20] sm:$0xf]
      %v391 = vld [vmem:[%s347 + $0x24] sm:$0x1]
      %v392 = vld [vmem:[%s347 + $0x28] sm:$0xf]
      %v393 = vld [vmem:[%s347 + $0x2c] sm:$0x1]
      %v394 = vld [vmem:[%s347 + $0x30] sm:$0xf]
      %v395 = vld [vmem:[%s347 + $0x34] sm:$0x1]
      %v396 = vld [vmem:[%s347 + $0x38] sm:$0xf]
      %v397 = vld [vmem:[%s347 + $0x3c] sm:$0x1]
      %v398 = vld [vmem:[%s366] sm:$0xf]
      %v399 = vld [vmem:[%s366 + $0x4] sm:$0x1]
      %vm400 = vsmask.f32 3328
      %vm401 = vsmask.f32 7440
      %vm402 = vmor %vm400, %vm401
      %v404 = vshrl.u32 %v382, 16
      %v406 = vrot.slane %v404, 4
      %v407 = vshll.u32 %v382, 16
      %v409 = vrot.slane %v407, 5
      %v410 = vor.u32 %v406, %v409
      %v411 = vrot.slane %v410, 4
      %v413 = vshll.u32 %v383, 16
      %v415 = vrot.slane %v413, 5
      %v416 = vsel %vm402, %v411, %v415
      %v418 = vshrl.u32 %v384, 16
      %v420 = vrot.slane %v418, 4
      %v421 = vshll.u32 %v384, 16
      %v423 = vrot.slane %v421, 5
      %v424 = vor.u32 %v420, %v423
      %v425 = vrot.slane %v424, 4
      %v427 = vshll.u32 %v385, 16
      %v429 = vrot.slane %v427, 5
      %v430 = vsel %vm402, %v425, %v429
      %v432 = vshrl.u32 %v386, 16
      %v434 = vrot.slane %v432, 4
      %v435 = vshll.u32 %v386, 16
      %v437 = vrot.slane %v435, 5
      %v438 = vor.u32 %v434, %v437
      %v439 = vrot.slane %v438, 4
      %v441 = vshll.u32 %v387, 16
      %v443 = vrot.slane %v441, 5
      %v444 = vsel %vm402, %v439, %v443
      %v446 = vshrl.u32 %v388, 16
      %v448 = vrot.slane %v446, 4
      %v449 = vshll.u32 %v388, 16
      %v451 = vrot.slane %v449, 5
      %v452 = vor.u32 %v448, %v451
      %v453 = vrot.slane %v452, 4
      %v455 = vshll.u32 %v389, 16
      %v457 = vrot.slane %v455, 5
      %v458 = vsel %vm402, %v453, %v457
      %v460 = vshrl.u32 %v390, 16
      %v462 = vrot.slane %v460, 4
      %v463 = vshll.u32 %v390, 16
      %v465 = vrot.slane %v463, 5
      %v466 = vor.u32 %v462, %v465
      %v467 = vrot.slane %v466, 4
      %v469 = vshll.u32 %v391, 16
      %v471 = vrot.slane %v469, 5
      %v472 = vsel %vm402, %v467, %v471
      %v474 = vshrl.u32 %v392, 16
      %v476 = vrot.slane %v474, 4
      %v477 = vshll.u32 %v392, 16
      %v479 = vrot.slane %v477, 5
      %v480 = vor.u32 %v476, %v479
      %v481 = vrot.slane %v480, 4
      %v483 = vshll.u32 %v393, 16
      %v485 = vrot.slane %v483, 5
      %v486 = vsel %vm402, %v481, %v485
      %v488 = vshrl.u32 %v394, 16
      %v490 = vrot.slane %v488, 4
      %v491 = vshll.u32 %v394, 16
      %v493 = vrot.slane %v491, 5
      %v494 = vor.u32 %v490, %v493
      %v495 = vrot.slane %v494, 4
      %v497 = vshll.u32 %v395, 16
      %v499 = vrot.slane %v497, 5
      %v500 = vsel %vm402, %v495, %v499
      %v502 = vshrl.u32 %v396, 16
      %v504 = vrot.slane %v502, 4
      %v505 = vshll.u32 %v396, 16
      %v507 = vrot.slane %v505, 5
      %v508 = vor.u32 %v504, %v507
      %v509 = vrot.slane %v508, 4
      %v511 = vshll.u32 %v397, 16
      %v513 = vrot.slane %v511, 5
      %v514 = vsel %vm402, %v509, %v513
      %v516 = vshrl.u32 %v398, 16
      %v518 = vrot.slane %v516, 4
      %v519 = vshll.u32 %v398, 16
      %v521 = vrot.slane %v519, 5
      %v522 = vor.u32 %v518, %v521
      %v523 = vrot.slane %v522, 4
      %v525 = vshll.u32 %v399, 16
      %v527 = vrot.slane %v525, 5
      %v528 = vsel %vm402, %v523, %v527
      %v537 = vunpack.c.l.b16 %v382
      %v538 = vunpack.c.l.b16 %v384
      %v539 = vunpack.c.l.b16 %v386
      %v540 = vunpack.c.l.b16 %v388
      %v541 = vunpack.c.l.b16 %v390
      %v542 = vunpack.c.l.b16 %v392
      %v543 = vunpack.c.l.b16 %v394
      %v544 = vunpack.c.l.b16 %v396
      %v545 = vpack.c.b16 %v538, %v537
      %v546 = vpack.c.b16 %v540, %v539
      %v547 = vpack.c.b16 %v542, %v541
      %v548 = vpack.c.b16 %v544, %v543
      %v549 = vunpack.c.l.b16 %v416
      %v550 = vunpack.c.l.b16 %v430
      %v551 = vunpack.c.l.b16 %v444
      %v552 = vunpack.c.l.b16 %v458
      %v553 = vunpack.c.l.b16 %v472
      %v554 = vunpack.c.l.b16 %v486
      %v555 = vunpack.c.l.b16 %v500
      %v556 = vunpack.c.l.b16 %v514
      %v557 = vpack.c.b16 %v550, %v549
      %v558 = vpack.c.b16 %v552, %v551
      %v559 = vpack.c.b16 %v554, %v553
      %v560 = vpack.c.b16 %v556, %v555
      %561 = vrot.lane.b32.xlu0 %v557, 16
      %v562 = vpop.permute.xlu0 %561
      %563 = vrot.lane.b32.xlu0 %v558, 16
      %v564 = vpop.permute.xlu0 %563
      %565 = vrot.lane.b32.xlu0 %v559, 16
      %v566 = vpop.permute.xlu0 %565
      %567 = vrot.lane.b32.xlu0 %v560, 16
      %v568 = vpop.permute.xlu0 %567
      %v570 = vunpack.c.l.b16 %v398
      %v571 = vpack.c.b16 %v539, %v538
      %v572 = vpack.c.b16 %v541, %v540
      %v573 = vpack.c.b16 %v543, %v542
      %v574 = vpack.c.b16 %v570, %v544
      %575 = vrot.lane.b32.xlu0 %v571, 32
      %v576 = vpop.permute.xlu0 %575
      %577 = vrot.lane.b32.xlu0 %v572, 32
      %v578 = vpop.permute.xlu0 %577
      %579 = vrot.lane.b32.xlu0 %v573, 32
      %v580 = vpop.permute.xlu0 %579
      %581 = vrot.lane.b32.xlu0 %v574, 32
      %v582 = vpop.permute.xlu0 %581
      %v583 = vunpack.c.l.b16 %v528
      %v584 = vpack.c.b16 %v551, %v550
      %v585 = vpack.c.b16 %v553, %v552
      %v586 = vpack.c.b16 %v555, %v554
      %v587 = vpack.c.b16 %v583, %v556
      %588 = vrot.lane.b32.xlu0 %v584, 48
      %v589 = vpop.permute.xlu0 %588
      %590 = vrot.lane.b32.xlu0 %v585, 48
      %v591 = vpop.permute.xlu0 %590
      %592 = vrot.lane.b32.xlu0 %v586, 48
      %v593 = vpop.permute.xlu0 %592
      %594 = vrot.lane.b32.xlu0 %v587, 48
      %v595 = vpop.permute.xlu0 %594
      %vm596 = vcmask 130048
      %v599 = vsel %vm596, %v545, %v562
      %v602 = vsel %vm596, %v546, %v564
      %v605 = vsel %vm596, %v547, %v566
      %v608 = vsel %vm596, %v548, %v568
      %vm609 = vcmask 261120
      %v611 = vsel %vm609, %v599, %v576
      %v613 = vsel %vm609, %v602, %v578
      %v615 = vsel %vm609, %v605, %v580
      %v617 = vsel %vm609, %v608, %v582
      %vm618 = vcmask 392192
      %v620 = vsel %vm618, %v611, %v589
      %v622 = vsel %vm618, %v613, %v591
      %v624 = vsel %vm618, %v615, %v593
      %v626 = vsel %vm618, %v617, %v595
      %v627 = vld [vmem:[%s2] sm:$0xf]
      %v628 = vld [vmem:[%s2 + $0x4] sm:$0xf]
      %v629 = vld [vmem:[%s2 + $0x8] sm:$0xf]
      %v630 = vld [vmem:[%s2 + $0xc] sm:$0xf]
      %v631 = vld [vmem:[%s2 + $0x10] sm:$0xf]
      %v632 = vld [vmem:[%s2 + $0x14] sm:$0xf]
      %v633 = vld [vmem:[%s2 + $0x18] sm:$0xf]
      %v634 = vld [vmem:[%s2 + $0x1c] sm:$0xf]
      %v635 = vld [vmem:[%s3] sm:$0x1]
      %v637 = vlaneseq
      %v638 = vshrl.u32 %v637, 7
      %v639 = vsub.s32 0, %v638
      %v640 = vrot.slane %v635, %v639
      %v650 = vunpack.c.l.b16 %v627
      %v651 = vunpack.c.l.b16 %v628
      %v652 = vunpack.c.l.b16 %v629
      %v653 = vunpack.c.l.b16 %v630
      %v654 = vunpack.c.l.b16 %v631
      %v655 = vunpack.c.l.b16 %v632
      %v656 = vunpack.c.l.b16 %v633
      %v657 = vunpack.c.l.b16 %v634
      %v658 = vpack.c.b16 %v651, %v650
      %v659 = vpack.c.b16 %v653, %v652
      %v660 = vpack.c.b16 %v655, %v654
      %v661 = vpack.c.b16 %v657, %v656
      %vm666 = vcmask 523264
      %v667 = vsel %vm666, %v620, 0
      %v669 = vsel %vm666, %v622, 0
      %v671 = vsel %vm666, %v624, 0
      %v673 = vsel %vm666, %v626, 0
      %675 = vmatprep.subr.bf16.mxu0 0
      %676 = vmatpush1.bf16.msra.mxu0 %v658
      %677 = vmatprep.subr.bf16.mxu0 0
      %678 = vmatpush1.bf16.msra.mxu0 %v659
      %679 = vmatprep.subr.bf16.mxu0 0
      %680 = vmatpush1.bf16.msra.mxu0 %v660
      %681 = vmatprep.subr.bf16.mxu0 0
      %682 = vmatpush1.bf16.msra.mxu0 %v661
      %683 = vmatprep.subr.bf16.mxu0 0
      %684 = vmatpush1.bf16.msra.mxu0 0
      %685 = vmatprep.subr.bf16.mxu0 0
      %686 = vmatpush1.bf16.msra.mxu0 0
      %687 = vmatprep.subr.bf16.mxu0 0
      %688 = vmatpush1.bf16.msra.mxu0 0
      %689 = vmatprep.subr.bf16.mxu0 0
      %690 = vmatpush1.bf16.msra.mxu0 0
      %691 = vmatprep.subr.bf16.mxu0 0
      %692 = vmatpush1.bf16.msra.mxu0 0
      %693 = vmatprep.subr.bf16.mxu0 0
      %694 = vmatpush1.bf16.msra.mxu0 0
      %695 = vmatprep.subr.bf16.mxu0 0
      %696 = vmatpush1.bf16.msra.mxu0 0
      %697 = vmatprep.subr.bf16.mxu0 0
      %698 = vmatpush1.bf16.msra.mxu0 0
      %699 = vmatprep.subr.bf16.mxu0 0
      %700 = vmatpush1.bf16.msra.mxu0 0
      %701 = vmatprep.subr.bf16.mxu0 0
      %702 = vmatpush1.bf16.msra.mxu0 0
      %703 = vmatprep.subr.bf16.mxu0 0
      %704 = vmatpush1.bf16.msra.mxu0 0
      %705 = vmatprep.subr.bf16.mxu0 0
      %706 = vmatpush1.bf16.msra.mxu0 0
      %707 = vmatprep.mubr.bf16.mxu0 0
      %708 = vmatmul.mubr.bf16.gmra.mrb[0].mxu0 %v667
      %v709 = vpop.f32.mrb[0].mxu0
      %v710 = vadd.f32 %v640, %v709
      %v711 = vpop.f32.mrb[0].mxu0
      %v712 = vpop.f32.mrb[0].mxu0
      %v713 = vadd.f32 %v640, %v712
      %v714 = vpop.f32.mrb[0].mxu0
      %715 = vmatprep.mubr.bf16.mxu0 0
      %716 = vmatmul.mubr.bf16.gmra.mrb[0].mxu0 %v669
      %v717 = vpop.f32.mrb[0].mxu0
      %v718 = vadd.f32 %v640, %v717
      %v719 = vpop.f32.mrb[0].mxu0
      %v720 = vpop.f32.mrb[0].mxu0
      %v721 = vadd.f32 %v640, %v720
      %v722 = vpop.f32.mrb[0].mxu0
      %723 = vmatprep.mubr.bf16.mxu0 0
      %724 = vmatmul.mubr.bf16.gmra.mrb[0].mxu0 %v671
      %v725 = vpop.f32.mrb[0].mxu0
      %v726 = vadd.f32 %v640, %v725
      %v727 = vpop.f32.mrb[0].mxu0
      %v728 = vpop.f32.mrb[0].mxu0
      %v729 = vadd.f32 %v640, %v728
      %v730 = vpop.f32.mrb[0].mxu0
      %731 = vmatprep.mubr.bf16.mxu0 0
      %732 = vmatmul.mubr.bf16.gmra.mrb[0].mxu0 %v673
      %v733 = vpop.f32.mrb[0].mxu0
      %v734 = vadd.f32 %v640, %v733
      %v735 = vpop.f32.mrb[0].mxu0
      %v736 = vpop.f32.mrb[0].mxu0
      %v737 = vadd.f32 %v640, %v736
      %v738 = vpop.f32.mrb[0].mxu0
      %739 = vdwg.mxu0
      %v740 = vxor.u32 %v710, 2147483648
      %v741 = vxor.u32 %v713, 2147483648
      %v742 = vxor.u32 %v718, 2147483648
      %v743 = vxor.u32 %v721, 2147483648
      %v744 = vxor.u32 %v726, 2147483648
      %v745 = vxor.u32 %v729, 2147483648
      %v746 = vxor.u32 %v734, 2147483648
      %v747 = vxor.u32 %v737, 2147483648
      %v748 = vmul.f32 %v740, 1.442695
      %v749 = vpow.pop %v748
      %v750 = vmul.f32 %v741, 1.442695
      %v751 = vpow.pop %v750
      %v752 = vmul.f32 %v742, 1.442695
      %v753 = vpow.pop %v752
      %v754 = vmul.f32 %v743, 1.442695
      %v755 = vpow.pop %v754
      %v756 = vmul.f32 %v744, 1.442695
      %v757 = vpow.pop %v756
      %v758 = vmul.f32 %v745, 1.442695
      %v759 = vpow.pop %v758
      %v760 = vmul.f32 %v746, 1.442695
      %v761 = vpow.pop %v760
      %v762 = vmul.f32 %v747, 1.442695
      %v763 = vpow.pop %v762
      %v764 = vadd.f32 %v749, 1.0
      %v765 = vadd.f32 %v751, 1.0
      %v766 = vadd.f32 %v753, 1.0
      %v767 = vadd.f32 %v755, 1.0
      %v768 = vadd.f32 %v757, 1.0
      %v769 = vadd.f32 %v759, 1.0
      %v770 = vadd.f32 %v761, 1.0
      %v771 = vadd.f32 %v763, 1.0
      %v772 = vrcp.pop %v764
      %v773 = vmul.f32 1.0, %v772
      %v774 = vrcp.pop %v765
      %v775 = vmul.f32 1.0, %v774
      %v776 = vrcp.pop %v766
      %v777 = vmul.f32 1.0, %v776
      %v778 = vrcp.pop %v767
      %v779 = vmul.f32 1.0, %v778
      %v780 = vrcp.pop %v768
      %v781 = vmul.f32 1.0, %v780
      %v782 = vrcp.pop %v769
      %v783 = vmul.f32 1.0, %v782
      %v784 = vrcp.pop %v770
      %v785 = vmul.f32 1.0, %v784
      %v786 = vrcp.pop %v771
      %v787 = vmul.f32 1.0, %v786
      %v788 = vmul.f32 %v710, %v773
      %v789 = vmul.f32 %v713, %v775
      %v790 = vmul.f32 %v718, %v777
      %v791 = vmul.f32 %v721, %v779
      %v792 = vmul.f32 %v726, %v781
      %v793 = vmul.f32 %v729, %v783
      %v794 = vmul.f32 %v734, %v785
      %v795 = vmul.f32 %v737, %v787
      %796 = vrot.lane.b32.xlu0 %v416, 4
      %v797 = vpop.permute.xlu0 %796
      %798 = vrot.lane.b32.xlu0 %v430, 4
      %v799 = vpop.permute.xlu0 %798
      %800 = vrot.lane.b32.xlu0 %v444, 4
      %v801 = vpop.permute.xlu0 %800
      %802 = vrot.lane.b32.xlu0 %v458, 4
      %v803 = vpop.permute.xlu0 %802
      %804 = vrot.lane.b32.xlu0 %v472, 4
      %v805 = vpop.permute.xlu0 %804
      %806 = vrot.lane.b32.xlu0 %v486, 4
      %v807 = vpop.permute.xlu0 %806
      %808 = vrot.lane.b32.xlu0 %v500, 4
      %v809 = vpop.permute.xlu0 %808
      %810 = vrot.lane.b32.xlu0 %v514, 4
      %v811 = vpop.permute.xlu0 %810
      %v820 = vmax.bf16 %v382, %v797
      %v821 = vmax.bf16 %v384, %v799
      %v822 = vmax.bf16 %v386, %v801
      %v823 = vmax.bf16 %v388, %v803
      %v824 = vmax.bf16 %v390, %v805
      %v825 = vmax.bf16 %v392, %v807
      %v826 = vmax.bf16 %v394, %v809
      %v827 = vmax.bf16 %v396, %v811
      %828 = vrot.lane.b32.xlu0 %v528, 4
      %v829 = vpop.permute.xlu0 %828
      %v831 = vmax.bf16 %v398, %v829
      %840 = vrot.lane.b32.xlu0 %v821, 8
      %v841 = vpop.permute.xlu0 %840
      %842 = vrot.lane.b32.xlu0 %v822, 8
      %v843 = vpop.permute.xlu0 %842
      %844 = vrot.lane.b32.xlu0 %v823, 8
      %v845 = vpop.permute.xlu0 %844
      %846 = vrot.lane.b32.xlu0 %v824, 8
      %v847 = vpop.permute.xlu0 %846
      %848 = vrot.lane.b32.xlu0 %v825, 8
      %v849 = vpop.permute.xlu0 %848
      %850 = vrot.lane.b32.xlu0 %v826, 8
      %v851 = vpop.permute.xlu0 %850
      %852 = vrot.lane.b32.xlu0 %v827, 8
      %v853 = vpop.permute.xlu0 %852
      %854 = vrot.lane.b32.xlu0 %v831, 8
      %v855 = vpop.permute.xlu0 %854
      %v864 = vmax.bf16 %v820, %v841
      %v865 = vmax.bf16 %v821, %v843
      %v866 = vmax.bf16 %v822, %v845
      %v867 = vmax.bf16 %v823, %v847
      %v868 = vmax.bf16 %v824, %v849
      %v869 = vmax.bf16 %v825, %v851
      %v870 = vmax.bf16 %v826, %v853
      %v871 = vmax.bf16 %v827, %v855
      %v872 = vpack.c.bf16 %v789, %v788
      %v873 = vpack.c.bf16 %v791, %v790
      %v874 = vpack.c.bf16 %v793, %v792
      %v875 = vpack.c.bf16 %v795, %v794
      %v884 = vunpack.c.l.b16 %v864
      %v885 = vunpack.c.l.b16 %v865
      %v886 = vunpack.c.l.b16 %v866
      %v887 = vunpack.c.l.b16 %v867
      %v888 = vunpack.c.l.b16 %v868
      %v889 = vunpack.c.l.b16 %v869
      %v890 = vunpack.c.l.b16 %v870
      %v891 = vunpack.c.l.b16 %v871
      %v892 = vpack.c.b16 %v885, %v884
      %v893 = vpack.c.b16 %v887, %v886
      %v894 = vpack.c.b16 %v889, %v888
      %v895 = vpack.c.b16 %v891, %v890
      %896 = vrot.lane.b32.xlu0 %v892, 116
      %v897 = vpop.permute.xlu0 %896
      %898 = vrot.lane.b32.xlu0 %v893, 116
      %v899 = vpop.permute.xlu0 %898
      %900 = vrot.lane.b32.xlu0 %v894, 116
      %v901 = vpop.permute.xlu0 %900
      %902 = vrot.lane.b32.xlu0 %v895, 116
      %v903 = vpop.permute.xlu0 %902
      %908 = vrot.lane.b32.xlu0 %v872, 4
      %v909 = vpop.permute.xlu0 %908
      %910 = vrot.lane.b32.xlu0 %v873, 4
      %v911 = vpop.permute.xlu0 %910
      %912 = vrot.lane.b32.xlu0 %v874, 4
      %v913 = vpop.permute.xlu0 %912
      %914 = vrot.lane.b32.xlu0 %v875, 4
      %v915 = vpop.permute.xlu0 %914
      %vm916 = vcmask 31744
      %v919 = vsel %vm916, %v897, %v909
      %v922 = vsel %vm916, %v899, %v911
      %v925 = vsel %vm916, %v901, %v913
      %v928 = vsel %vm916, %v903, %v915
      %v929 = vld [vmem:[%s4] sm:$0xf]
      %v930 = vld [vmem:[%s5] sm:$0x1]
      %v932 = vlaneseq
      %v933 = vshrl.u32 %v932, 7
      %v934 = vsub.s32 0, %v933
      %v935 = vrot.slane %v930, %v934
      %vm937 = vcmask 64512
      %v938 = vsel %vm937, %v919, 0
      %v940 = vsel %vm937, %v922, 0
      %v942 = vsel %vm937, %v925, 0
      %v944 = vsel %vm937, %v928, 0
      %vm946 = vcmask 1043456
      %v948 = vsel %vm946, %v929, 0
      %950 = vmatprep.subr.bf16.mxu0 0
      %951 = vmatpush1.bf16.msra.mxu0 %v948
      %952 = vmatprep.subr.bf16.mxu0 0
      %953 = vmatpush1.bf16.msra.mxu0 0
      %954 = vmatprep.subr.bf16.mxu0 0
      %955 = vmatpush1.bf16.msra.mxu0 0
      %956 = vmatprep.subr.bf16.mxu0 0
      %957 = vmatpush1.bf16.msra.mxu0 0
      %958 = vmatprep.subr.bf16.mxu0 0
      %959 = vmatpush1.bf16.msra.mxu0 0
      %960 = vmatprep.subr.bf16.mxu0 0
      %961 = vmatpush1.bf16.msra.mxu0 0
      %962 = vmatprep.subr.bf16.mxu0 0
      %963 = vmatpush1.bf16.msra.mxu0 0
      %964 = vmatprep.subr.bf16.mxu0 0
      %965 = vmatpush1.bf16.msra.mxu0 0
      %966 = vmatprep.subr.bf16.mxu0 0
      %967 = vmatpush1.bf16.msra.mxu0 0
      %968 = vmatprep.subr.bf16.mxu0 0
      %969 = vmatpush1.bf16.msra.mxu0 0
      %970 = vmatprep.subr.bf16.mxu0 0
      %971 = vmatpush1.bf16.msra.mxu0 0
      %972 = vmatprep.subr.bf16.mxu0 0
      %973 = vmatpush1.bf16.msra.mxu0 0
      %974 = vmatprep.subr.bf16.mxu0 0
      %975 = vmatpush1.bf16.msra.mxu0 0
      %976 = vmatprep.subr.bf16.mxu0 0
      %977 = vmatpush1.bf16.msra.mxu0 0
      %978 = vmatprep.subr.bf16.mxu0 0
      %979 = vmatpush1.bf16.msra.mxu0 0
      %980 = vmatprep.subr.bf16.mxu0 0
      %981 = vmatpush1.bf16.msra.mxu0 0
      %982 = vmatprep.mubr.bf16.mxu0 0
      %983 = vmatmul.mubr.bf16.gmra.mrb[0].mxu0 %v938
      %v984 = vpop.f32.mrb[0].mxu0
      %v985 = vadd.f32 %v935, %v984
      %v986 = vpop.f32.mrb[0].mxu0
      %v987 = vpop.f32.mrb[0].mxu0
      %v988 = vadd.f32 %v935, %v987
      %v989 = vpop.f32.mrb[0].mxu0
      %990 = vmatprep.mubr.bf16.mxu0 0
      %991 = vmatmul.mubr.bf16.gmra.mrb[0].mxu0 %v940
      %v992 = vpop.f32.mrb[0].mxu0
      %v993 = vadd.f32 %v935, %v992
      %v994 = vpop.f32.mrb[0].mxu0
      %v995 = vpop.f32.mrb[0].mxu0
      %v996 = vadd.f32 %v935, %v995
      %v997 = vpop.f32.mrb[0].mxu0
      %998 = vmatprep.mubr.bf16.mxu0 0
      %999 = vmatmul.mubr.bf16.gmra.mrb[0].mxu0 %v942
      %v1000 = vpop.f32.mrb[0].mxu0
      %v1001 = vadd.f32 %v935, %v1000
      %v1002 = vpop.f32.mrb[0].mxu0
      %v1003 = vpop.f32.mrb[0].mxu0
      %v1004 = vadd.f32 %v935, %v1003
      %v1005 = vpop.f32.mrb[0].mxu0
      %1006 = vmatprep.mubr.bf16.mxu0 0
      %1007 = vmatmul.mubr.bf16.gmra.mrb[0].mxu0 %v944
      %v1008 = vpop.f32.mrb[0].mxu0
      %v1009 = vadd.f32 %v935, %v1008
      %v1010 = vpop.f32.mrb[0].mxu0
      %v1011 = vpop.f32.mrb[0].mxu0
      %v1012 = vadd.f32 %v935, %v1011
      %v1013 = vpop.f32.mrb[0].mxu0
      %1014 = vdwg.mxu0
      %v1015 = vxor.u32 %v985, 2147483648
      %v1016 = vxor.u32 %v988, 2147483648
      %v1017 = vxor.u32 %v993, 2147483648
      %v1018 = vxor.u32 %v996, 2147483648
      %v1019 = vxor.u32 %v1001, 2147483648
      %v1020 = vxor.u32 %v1004, 2147483648
      %v1021 = vxor.u32 %v1009, 2147483648
      %v1022 = vxor.u32 %v1012, 2147483648
      %v1023 = vmul.f32 %v1015, 1.442695
      %v1024 = vpow.pop %v1023
      %v1025 = vmul.f32 %v1016, 1.442695
      %v1026 = vpow.pop %v1025
      %v1027 = vmul.f32 %v1017, 1.442695
      %v1028 = vpow.pop %v1027
      %v1029 = vmul.f32 %v1018, 1.442695
      %v1030 = vpow.pop %v1029
      %v1031 = vmul.f32 %v1019, 1.442695
      %v1032 = vpow.pop %v1031
      %v1033 = vmul.f32 %v1020, 1.442695
      %v1034 = vpow.pop %v1033
      %v1035 = vmul.f32 %v1021, 1.442695
      %v1036 = vpow.pop %v1035
      %v1037 = vmul.f32 %v1022, 1.442695
      %v1038 = vpow.pop %v1037
      %v1039 = vadd.f32 %v1024, 1.0
      %v1040 = vadd.f32 %v1026, 1.0
      %v1041 = vadd.f32 %v1028, 1.0
      %v1042 = vadd.f32 %v1030, 1.0
      %v1043 = vadd.f32 %v1032, 1.0
      %v1044 = vadd.f32 %v1034, 1.0
      %v1045 = vadd.f32 %v1036, 1.0
      %v1046 = vadd.f32 %v1038, 1.0
      %v1047 = vrcp.pop %v1039
      %v1048 = vmul.f32 1.0, %v1047
      %v1049 = vrcp.pop %v1040
      %v1050 = vmul.f32 1.0, %v1049
      %v1051 = vrcp.pop %v1041
      %v1052 = vmul.f32 1.0, %v1051
      %v1053 = vrcp.pop %v1042
      %v1054 = vmul.f32 1.0, %v1053
      %v1055 = vrcp.pop %v1043
      %v1056 = vmul.f32 1.0, %v1055
      %v1057 = vrcp.pop %v1044
      %v1058 = vmul.f32 1.0, %v1057
      %v1059 = vrcp.pop %v1045
      %v1060 = vmul.f32 1.0, %v1059
      %v1061 = vrcp.pop %v1046
      %v1062 = vmul.f32 1.0, %v1061
      %v1063 = vmul.f32 %v985, %v1048
      %v1064 = vmul.f32 %v988, %v1050
      %v1065 = vmul.f32 %v993, %v1052
      %v1066 = vmul.f32 %v996, %v1054
      %v1067 = vmul.f32 %v1001, %v1056
      %v1068 = vmul.f32 %v1004, %v1058
      %v1069 = vmul.f32 %v1009, %v1060
      %v1070 = vmul.f32 %v1012, %v1062
      %v1071 = vpack.c.bf16 %v1063, %v1063
      %v1072 = vpack.c.bf16 %v1064, %v1064
      %v1073 = vpack.c.bf16 %v1065, %v1065
      %v1074 = vpack.c.bf16 %v1066, %v1066
      %v1075 = vpack.c.bf16 %v1067, %v1067
      %v1076 = vpack.c.bf16 %v1068, %v1068
      %v1077 = vpack.c.bf16 %v1069, %v1069
      %v1078 = vpack.c.bf16 %v1070, %v1070
      %vm1079 = vcmask 60416
      %1080 = vst.msk [vmem:[%s379] sm:$0xf] %vm1079, %v1071
      %1081 = vst.msk [vmem:[%s379 + $0x4] sm:$0xf] %vm1079, %v1072
      %1082 = vst.msk [vmem:[%s379 + $0x8] sm:$0xf] %vm1079, %v1073
      %1083 = vst.msk [vmem:[%s379 + $0xc] sm:$0xf] %vm1079, %v1074
      %1084 = vst.msk [vmem:[%s379 + $0x10] sm:$0xf] %vm1079, %v1075
      %1085 = vst.msk [vmem:[%s379 + $0x14] sm:$0xf] %vm1079, %v1076
      %1086 = vst.msk [vmem:[%s379 + $0x18] sm:$0xf] %vm1079, %v1077
      %1087 = vst.msk [vmem:[%s379 + $0x1c] sm:$0xf] %vm1079, %v1078
      %s1088 = smul.u32 8, %s22
      %p1089 = scmp.lt.s32.totalorder %s21, 1
      %s1090 = scalar_select %p1089, %s21, 1
      %p1091 = scmp.lt.s32.totalorder %s1088, 7
      %s1092 = scalar_select %p1091, %s1088, 7
      %s1093 = smul.addr %s1090, 8
      %s1094 = sadd.s32 %s1092, %s1093
      %s1095 = smul.addr %s1094, 4
      %s1096 = scalar_lea.vmem %s6, %s1095
      // Predicated region
      $region45: #{_lambda_.1} parent=43 // pred_check
        %p1097 = pneg %p197
      $region46: #{_lambda_.1} parent=43 // pred_check_branch
        %1099 = sbr.rel (%p1097) target = $region48
      $region47: #{_lambda_.1} parent=43 // pred_region
        %s1100 = smul.u32 8, %s22
      $region48: #{_lambda_.1} parent=43 // pred_fallthru
        _
    $region44: #{_lambda_.1} parent=5 // pred_fallthru
      _
    %p1101 = scmp.le.s32.totalorder 2, %s12
    // Predicated region
    $region49: #{_lambda_.1} parent=5 // pred_check
      %p1102 = pneg %p1101
    $region50: #{_lambda_.1} parent=5 // pred_check_branch
      %1104 = sbr.rel (%p1102) target = $region52
    $region51: #{_lambda_.1} parent=5 // pred_region
      %s1105 = ssub.s32 %s12, 2
      // Predicated region
      $region53: #{_lambda_.1} parent=51 // pred_check
        %p1106 = pneg %p203
      $region54: #{_lambda_.1} parent=51 // pred_check_branch
        %1108 = sbr.rel (%p1106) target = $region56
      $region55: #{_lambda_.1} parent=51 // pred_region
        %s1109 = smul.u32 8, %s24
        %p1110 = scmp.lt.s32.totalorder %s23, 1
        %s1111 = scalar_select %p1110, %s23, 1
        %p1112 = scmp.lt.s32.totalorder %s1109, 7
        %s1113 = scalar_select %p1112, %s1109, 7
        %s1114 = smul.addr %s1111, 8
        %s1115 = sadd.s32 %s1113, %s1114
        %s1116 = smul.addr %s1115, 4
        %s1117 = scalar_lea.vmem %s6, %s1116
      $region56: #{_lambda_.1} parent=51 // pred_fallthru
        _
    $region52: #{_lambda_.1} parent=5 // pred_fallthru
      _
  $region6: #{_lambda_.1} parent=0 // loop_footer
    %s16 = sadd.s32 1, %s12
  $region7: #{_lambda_.1} parent=0 // loop_footer_branch
    %11 = sbr.rel target = $region3
  $region8: #{_lambda_.1} parent=0 // loop_exit
    _

</llo_original>
